<compile_context>
chip_gen: v7x
topology: tpu7x:2x2x1
jax: 0.10.0
libtpu: 0.0.40
codegen_flags: <defaults>
</compile_context>

<pallas_src>
import jax
import jax.numpy as jnp
from jax.experimental import pallas as pl
from jax.experimental.pallas import tpu as pltpu


def search_toy_kernel(alpha_ref, params_ref, x_ref, out_ref):
    # alpha_ref : SMEM f32[3]   raw alphas_ (scalar-prefetch); softmax in-kernel
    # params_ref: VMEM f32[40, 4] packed parameter slab:
    #               [0:25,  0:4] = w_cat  (cols 0-1 = w3^T, cols 2-3 = padded w2^T)
    #               [32:34, 0:2] = wsm^T
    #               [34:35, 0:2] = r1s = model1 @ wsm^T
    # x_ref     : VMEM f32[TB, 25]
    # out_ref   : VMEM f32[TB, 2]

    # 3-way softmax over the architecture alphas (scalar path in SMEM).
    a0 = alpha_ref[0]
    a1 = alpha_ref[1]
    a2 = alpha_ref[2]
    m = jnp.maximum(jnp.maximum(a0, a1), a2)
    e0 = jnp.exp(a0 - m)
    e1 = jnp.exp(a1 - m)
    e2 = jnp.exp(a2 - m)
    inv_s = 1.0 / (e0 + e1 + e2)
    a0 = e0 * inv_s
    a1 = e1 * inv_s
    a2 = e2 * inv_s

    w_cat = params_ref[0:25, :]       # (25, 4)
    wsmt = params_ref[32:34, 0:2]     # (2, 2)
    r1s = params_ref[34:35, 0:2]      # (1, 2)  == model1 @ wsm^T

    x = x_ref[...]                    # (TB, 25)

    # Single fused MXU dot + single tanh pass: y[:, :2] = r3, y[:, 2:4] = r2.
    y = jnp.tanh(jnp.dot(x, w_cat, preferred_element_type=jnp.float32))   # (TB, 4)

    # mix = a1 * r2 + a2 * r3  (the a0 * r1 term is folded through wsm^T below)
    mix = y[:, :2] * a2 + y[:, 2:4] * a1                                   # (TB, 2)

    out_ref[...] = (
        jnp.dot(mix, wsmt, preferred_element_type=jnp.float32) + a0 * r1s
    )


def search_toy_controller(x, alphas_, model1, w2, w3, wsm, tb=4096):
    """x: (B, 25) f32.  w2: (2,1), w3: (2,25), wsm: (2,2) — PyTorch Linear layout."""
    f32 = jnp.float32
    x = x.astype(f32)
    B = x.shape[0]

    # --- fused / packed parameter prep (pure weight transforms) ---
    w3t = jnp.transpose(w3).astype(f32)                       # (25, 2)
    w2t_pad = jnp.zeros((25, 2), f32).at[0, :].set(w2[:, 0].astype(f32))
    w_cat = jnp.concatenate([w3t, w2t_pad], axis=1)           # (25, 4)
    wsmt = jnp.transpose(wsm).astype(f32)                     # (2, 2)
    r1s = model1.astype(f32).reshape(1, 2) @ wsmt             # (1, 2) constant branch

    params = jnp.zeros((40, 4), f32)
    params = params.at[0:25, :].set(w_cat)
    params = params.at[32:34, 0:2].set(wsmt)
    params = params.at[34:35, 0:2].set(r1s)

    # --- batch tiling (TB multiple of 8 when tiled; pad B up if needed) ---
    tb = min(tb, B)
    nb = pl.cdiv(B, tb)
    bp = nb * tb
    if bp != B:
        x = jnp.pad(x, ((0, bp - B), (0, 0)))

    out = pl.pallas_call(
        search_toy_kernel,
        out_shape=jax.ShapeDtypeStruct((bp, 2), f32),
        grid_spec=pltpu.PrefetchScalarGridSpec(
            num_scalar_prefetch=1,                 # alphas_ -> SMEM
            grid=(nb,),
            in_specs=[
                pl.BlockSpec((40, 4), lambda i, alphas: (0, 0)),   # params slab
                pl.BlockSpec((tb, 25), lambda i, alphas: (i, 0)),  # x tile
            ],
            out_specs=pl.BlockSpec((tb, 2), lambda i, alphas: (i, 0)),
        ),
        compiler_params=pltpu.CompilerParams(
            dimension_semantics=("parallel",)),    # shard batch tiles across TCs
    )(alphas_.astype(f32), params, x)

    return out[:B] if bp != B else out


def reference(x, alphas_, model1, w2, w3, wsm):
    a = jax.nn.softmax(alphas_, axis=-1)
    r1 = model1                                   # (2,)
    r2 = jnp.tanh(x[:, :1] @ w2.T)                # (B, 2)
    r3 = jnp.tanh(x @ w3.T)                       # (B, 2)
    return (r1 * a[0] + r2 * a[1] + r3 * a[2]) @ wsm.T


if __name__ == "__main__":
    key = jax.random.PRNGKey(0)
    k_x, k_a, k_w2, k_w3, k_wsm = jax.random.split(key, 5)

    B = 8
    x = jax.random.normal(k_x, (B, 25), dtype=jnp.float32)

    # Deterministic parameter init mirroring the module's __init__ shapes.
    alphas_ = 0.001 * jax.random.normal(k_a, (3,), dtype=jnp.float32)
    model1 = jnp.ones((2,), dtype=jnp.float32)
    w2 = jax.random.normal(k_w2, (2, 1), dtype=jnp.float32) * (1.0 / jnp.sqrt(1.0))
    w3 = jax.random.normal(k_w3, (2, 25), dtype=jnp.float32) * (1.0 / jnp.sqrt(25.0))
    wsm = jax.random.normal(k_wsm, (2, 2), dtype=jnp.float32) * (1.0 / jnp.sqrt(2.0))

    out = search_toy_controller(x, alphas_, model1, w2, w3, wsm)
    out = jax.block_until_ready(out)

    ref = reference(x, alphas_, model1, w2, w3, wsm)
    assert out.shape == (B, 2)
    assert jnp.allclose(out, ref, atol=1e-5, rtol=1e-5), (out, ref)

    print("KERNEL_OK")
</pallas_src>

<mosaic_0001>
module attributes {stable_mosaic.version = 11 : i64} {
  func.func @search_toy_kernel(%arg0: i32, %arg1: memref<3xf32, #tpu.memory_space<smem>>, %arg2: memref<40x4xf32, #tpu.memory_space<vmem>>, %arg3: memref<8x25xf32, #tpu.memory_space<vmem>>, %arg4: memref<8x2xf32, #tpu.memory_space<vmem>>) attributes {dimension_semantics = [#tpu.dimension_semantics<parallel>], iteration_bounds = array<i64: 1>, scalar_prefetch = 1 : i64, scratch_operands = 0 : i64, tpu.core_type = #tpu.core_type<tc>, window_params = [{pipeline_mode = #tpu.pipeline_mode<synchronous>, transform_indices = @transform_0, window_bounds = array<i64: 40, 4>}, {transform_indices = @transform_1, window_bounds = array<i64: 8, 25>}, {transform_indices = @transform_2, window_bounds = array<i64: 8, 2>}]} {
    %c0 = arith.constant 0 : index
    %0 = memref.load %arg1[%c0] : memref<3xf32, #tpu.memory_space<smem>>
    %c1 = arith.constant 1 : index
    %1 = memref.load %arg1[%c1] : memref<3xf32, #tpu.memory_space<smem>>
    %c2 = arith.constant 2 : index
    %2 = memref.load %arg1[%c2] : memref<3xf32, #tpu.memory_space<smem>>
    %3 = arith.maximumf %0, %1 : f32
    %4 = arith.maximumf %3, %2 : f32
    %5 = arith.subf %0, %4 : f32
    %6 = math.exp %5 : f32
    %7 = arith.subf %1, %4 : f32
    %8 = math.exp %7 : f32
    %9 = arith.subf %2, %4 : f32
    %10 = math.exp %9 : f32
    %11 = arith.addf %6, %8 : f32
    %12 = arith.addf %11, %10 : f32
    %cst = arith.constant 1.000000e+00 : f32
    %13 = arith.divf %cst, %12 : f32
    %14 = arith.mulf %6, %13 : f32
    %15 = arith.mulf %8, %13 : f32
    %16 = arith.mulf %10, %13 : f32
    %c0_0 = arith.constant 0 : index
    %c0_1 = arith.constant 0 : index
    %17 = vector.load %arg2[%c0_0, %c0_1] : memref<40x4xf32, #tpu.memory_space<vmem>>, vector<25x4xf32>
    %c32 = arith.constant 32 : index
    %c0_2 = arith.constant 0 : index
    %18 = vector.load %arg2[%c32, %c0_2] : memref<40x4xf32, #tpu.memory_space<vmem>>, vector<2x2xf32>
    %c34 = arith.constant 34 : index
    %c0_3 = arith.constant 0 : index
    %19 = vector.load %arg2[%c34, %c0_3] : memref<40x4xf32, #tpu.memory_space<vmem>>, vector<1x2xf32>
    %c0_4 = arith.constant 0 : index
    %c0_5 = arith.constant 0 : index
    %20 = vector.load %arg3[%c0_4, %c0_5] : memref<8x25xf32, #tpu.memory_space<vmem>>, vector<8x25xf32>
    %cst_6 = arith.constant dense<0.000000e+00> : vector<8x4xf32>
    %21 = tpu.matmul %20, %17, %cst_6 {dimension_numbers = #tpu.dot_dimension_numbers<[1], [0], [0], [1], [0, 0, 1, 1], [], []>} : vector<8x25xf32>, vector<25x4xf32>, vector<8x4xf32> -> vector<8x4xf32>
    %22 = math.tanh %21 : vector<8x4xf32>
    %23 = vector.extract_strided_slice %22 {offsets = [0, 0], sizes = [8, 2], strides = [1, 1]} : vector<8x4xf32> to vector<8x2xf32>
    %24 = vector.broadcast %16 : f32 to vector<8x2xf32>
    %25 = arith.mulf %23, %24 : vector<8x2xf32>
    %26 = vector.extract_strided_slice %22 {offsets = [0, 2], sizes = [8, 2], strides = [1, 1]} : vector<8x4xf32> to vector<8x2xf32>
    %27 = vector.broadcast %15 : f32 to vector<8x2xf32>
    %28 = arith.mulf %26, %27 : vector<8x2xf32>
    %29 = arith.addf %25, %28 : vector<8x2xf32>
    %cst_7 = arith.constant dense<0.000000e+00> : vector<8x2xf32>
    %30 = tpu.matmul %29, %18, %cst_7 {dimension_numbers = #tpu.dot_dimension_numbers<[1], [0], [0], [1], [0, 0, 1, 1], [], []>} : vector<8x2xf32>, vector<2x2xf32>, vector<8x2xf32> -> vector<8x2xf32>
    %31 = vector.broadcast %14 : f32 to vector<1x2xf32>
    %32 = arith.mulf %31, %19 : vector<1x2xf32>
    %33 = vector.broadcast %32 : vector<1x2xf32> to vector<8x2xf32>
    %34 = arith.addf %30, %33 : vector<8x2xf32>
    %c0_8 = arith.constant 0 : index
    %c0_9 = arith.constant 0 : index
    %35 = vector.load %arg4[%c0_8, %c0_9] : memref<8x2xf32, #tpu.memory_space<vmem>>, vector<8x2xf32>
    tpu.vector_store %arg4[%c0_8, %c0_9], %34 {strides = array<i32>} : memref<8x2xf32, #tpu.memory_space<vmem>>, vector<8x2xf32>,
    return
  }
  func.func @transform_0(%arg0: i32, %arg1: memref<3xf32, #tpu.memory_space<smem>>) -> (i32, i32) {
    %c0_i32 = arith.constant 0 : i32
    %c0_i32_0 = arith.constant 0 : i32
    %c0_i32_1 = arith.constant 0 : i32
    return %c0_i32, %c0_i32_0 : i32, i32
  }
  func.func @transform_1(%arg0: i32, %arg1: memref<3xf32, #tpu.memory_space<smem>>) -> (i32, i32) {
    %c0_i32 = arith.constant 0 : i32
    %c0_i32_0 = arith.constant 0 : i32
    return %arg0, %c0_i32 : i32, i32
  }
  func.func @transform_2(%arg0: i32, %arg1: memref<3xf32, #tpu.memory_space<smem>>) -> (i32, i32) {
    %c0_i32 = arith.constant 0 : i32
    %c0_i32_0 = arith.constant 0 : i32
    return %arg0, %c0_i32 : i32, i32
  }
}

</mosaic_0001>

<llo_original>
// kernel: tpu_custom_call.1
$region0: #{tpu_custom_call.1}
  #allocation0 [shape = 'u32[]', space=smem, size = 0x4, offset = 0x4, fixed_abs, tag = 'smem constant byte address 0x4 - core index']
  #allocation1 [shape = 'u32[144,128]{1,0:T(1,128)}', space=vmem, size = 0x12000, scoped, tag = 'internal scratch']
  #allocation2 [shape = 's32[1]{0}', space=sflag, size = 0x4, scoped, tag = 'scoped memory for tpu_custom_call.1']
  #allocation3 [shape = 'u8[512]{0}', space=smem, size = 0x200, scoped, tag = 'prefetched SMEM operand 0']
  %s0 = inlined_call_operand.vmem [shape: f32[3], index: 0, kind: input, shape index: {}]
  %s1 = inlined_call_operand.vmem [shape: f32[40,4], index: 1, kind: input, shape index: {}]
  %s2 = inlined_call_operand.vmem [shape: f32[8,25], index: 2, kind: input, shape index: {}]
  %s3 = inlined_call_operand.vmem [shape: f32[8,2], index: 3, kind: output, shape index: {}]
  %s4 = sld [smem:[#allocation0]]
  $region18: #{tpu_custom_call.1} parent=0
    _
  %s6 = ssub.s32 1, %s4
  %s7 = scalar_select 0, %s6, %s4
  %s8 = sshll.u32 %s0, 4
  %s9 = int_to_ptr.vmem [resolvable:$true] %s8
  %11 = dma.vmem_to_smem %s9, 16, [#allocation3], [#allocation2]
  %12 = dma.done [#allocation2], 16
  %13 = sfence
  // Predicated region
  $region2: #{tpu_custom_call.1} parent=0 // pred_check
    _
  $region3: #{tpu_custom_call.1} parent=0 // pred_check_branch
    %15 = sbr.rel (0) target = $region5
  $region4: #{tpu_custom_call.1} parent=0 // pred_region
    _
  $region5: #{tpu_custom_call.1} parent=0 // pred_fallthru
    _
  // Predicated region
  $region6: #{tpu_custom_call.1} parent=0 // pred_check
    _
  $region7: #{tpu_custom_call.1} parent=0 // pred_check_branch
    %17 = sbr.rel (0) target = $region9
  $region8: #{tpu_custom_call.1} parent=0 // pred_region
    _
  $region9: #{tpu_custom_call.1} parent=0 // pred_fallthru
    _
  %s18 = sld [smem:[#allocation3]]
  %s19 = sld [smem:[#allocation3 + $0x1]]
  %s20 = sld [smem:[#allocation3 + $0x2]]
  %s21 = smax.f32 %s18, %s19
  %s22 = smax.f32 %s21, %s20
  %s23 = ssub.f32 %s18, %s22
  %v24 = vstv %s23
  %v25 = vmul.f32 %v24, 1.442695
  %v26 = vpow.pop %v25
  %s27 = vtos %v26
  %s28 = ssub.f32 %s19, %s22
  %v29 = vstv %s28
  %v30 = vmul.f32 %v29, 1.442695
  %v31 = vpow.pop %v30
  %s32 = vtos %v31
  %s33 = ssub.f32 %s20, %s22
  %v34 = vstv %s33
  %v35 = vmul.f32 %v34, 1.442695
  %v36 = vpow.pop %v35
  %s37 = vtos %v36
  %s38 = sadd.f32 %s27, %s32
  %s39 = sadd.f32 %s38, %s37
  %v40 = vstv %s39
  %v41 = vrcp.pop %v40
  %s42 = vtos %v41
  %s43 = smul.f32 %s27, %s42
  %s44 = smul.f32 %s32, %s42
  %s45 = smul.f32 %s37, %s42
  %v46 = vld [vmem:[%s1] sm:$0xff]
  %v47 = vld [vmem:[%s1 + $0x8] sm:$0xff]
  %v48 = vld [vmem:[%s1 + $0x10] sm:$0xff]
  %v49 = vld [vmem:[%s1 + $0x18] sm:$0x1]
  %v50 = vld [vmem:[%s1 + $0x20] sm:$0x3]
  %v51 = vld [vmem:[%s1 + $0x22] sm:$0x1]
  %v52 = vld [vmem:[%s2] sm:$0xff]
  %vm53 = vcmask 203776
  %v55 = vsel %vm53, %v52, 0
  %vm57 = vcmask 1040384
  %v59 = vsel %vm57, %v49, 0
  %61 = vmatprep.subr.mxu0 0.0
  %62 = vmatpush1.msra.mxu0 %v46
  %63 = vmatprep.subr.mxu0 0.0
  %64 = vmatpush1.msra.mxu0 %v47
  %65 = vmatprep.subr.mxu0 0.0
  %66 = vmatpush1.msra.mxu0 %v48
  %67 = vmatprep.subr.mxu0 0.0
  %68 = vmatpush1.msra.mxu0 %v59
  %69 = vmatprep.subr.mxu0 0.0
  %70 = vmatpush1.msra.mxu0 0.0
  %71 = vmatprep.subr.mxu0 0.0
  %72 = vmatpush1.msra.mxu0 0.0
  %73 = vmatprep.subr.mxu0 0.0
  %74 = vmatpush1.msra.mxu0 0.0
  %75 = vmatprep.subr.mxu0 0.0
  %76 = vmatpush1.msra.mxu0 0.0
  %77 = vmatprep.subr.mxu0 0.0
  %78 = vmatpush1.msra.mxu0 0.0
  %79 = vmatprep.subr.mxu0 0.0
  %80 = vmatpush1.msra.mxu0 0.0
  %81 = vmatprep.subr.mxu0 0.0
  %82 = vmatpush1.msra.mxu0 0.0
  %83 = vmatprep.subr.mxu0 0.0
  %84 = vmatpush1.msra.mxu0 0.0
  %85 = vmatprep.subr.mxu0 0.0
  %86 = vmatpush1.msra.mxu0 0.0
  %87 = vmatprep.subr.mxu0 0.0
  %88 = vmatpush1.msra.mxu0 0.0
  %89 = vmatprep.subr.mxu0 0.0
  %90 = vmatpush1.msra.mxu0 0.0
  %91 = vmatprep.subr.mxu0 0.0
  %92 = vmatpush1.msra.mxu0 0.0
  %93 = vmatprep.subr.mxu0 0.0
  %94 = vmatpush1.msra.mxu0 0.0
  %95 = vmatprep.subr.mxu0 0.0
  %96 = vmatpush1.msra.mxu0 0.0
  %97 = vmatprep.subr.mxu0 0.0
  %98 = vmatpush1.msra.mxu0 0.0
  %99 = vmatprep.subr.mxu0 0.0
  %100 = vmatpush1.msra.mxu0 0.0
  %101 = vmatprep.subr.mxu0 0.0
  %102 = vmatpush1.msra.mxu0 0.0
  %103 = vmatprep.subr.mxu0 0.0
  %104 = vmatpush1.msra.mxu0 0.0
  %105 = vmatprep.subr.mxu0 0.0
  %106 = vmatpush1.msra.mxu0 0.0
  %107 = vmatprep.subr.mxu0 0.0
  %108 = vmatpush1.msra.mxu0 0.0
  %109 = vmatprep.subr.mxu0 0.0
  %110 = vmatpush1.msra.mxu0 0.0
  %111 = vmatprep.subr.mxu0 0.0
  %112 = vmatpush1.msra.mxu0 0.0
  %113 = vmatprep.subr.mxu0 0.0
  %114 = vmatpush1.msra.mxu0 0.0
  %115 = vmatprep.subr.mxu0 0.0
  %116 = vmatpush1.msra.mxu0 0.0
  %117 = vmatprep.subr.mxu0 0.0
  %118 = vmatpush1.msra.mxu0 0.0
  %119 = vmatprep.subr.mxu0 0.0
  %120 = vmatpush1.msra.mxu0 0.0
  %121 = vmatprep.subr.mxu0 0.0
  %122 = vmatpush1.msra.mxu0 0.0
  %123 = vmatprep.subr.mxu0 0.0
  %124 = vmatpush1.msra.mxu0 0.0
  %125 = vmatprep.mubr.f32.mxu0 0.0
  %126 = vmatmul.mubr.f32.gmra.mrb[0].mxu0 %v55
  %v127 = vpop.f32.mrb[0].mxu0
  %v128 = vadd.f32 0.0, %v127
  %v129 = vpop.f32.mrb[0].mxu0
  %130 = vdwg.mxu0
  %v131 = vtanh.pop %v128
  %v132 = vstv %s45
  %v133 = vmul.f32 %v131, %v132
  %v134 = vstv %s44
  %v135 = vmul.f32 %v131, %v134
  %137 = vrot.lane.b32.xlu0 %v135, 126
  %v138 = vpop.permute.xlu0 %137
  %v140 = vadd.f32 %v133, %v138
  %v141 = vstv %s43
  %v142 = vmul.f32 %v141, %v51
  %v143 = vlaneseq
  %v144 = vshrl.u32 %v143, 7
  %v145 = vsub.s32 0, %v144
  %v146 = vrot.slane %v142, %v145
  %vm147 = vcmask 15360
  %v149 = vsel %vm147, %v140, 0
  %vm151 = vcmask 1041408
  %v153 = vsel %vm151, %v50, 0
  %155 = vmatprep.subr.mxu0 0.0
  %156 = vmatpush1.msra.mxu0 %v153
  %157 = vmatprep.subr.mxu0 0.0
  %158 = vmatpush1.msra.mxu0 0.0
  %159 = vmatprep.subr.mxu0 0.0
  %160 = vmatpush1.msra.mxu0 0.0
  %161 = vmatprep.subr.mxu0 0.0
  %162 = vmatpush1.msra.mxu0 0.0
  %163 = vmatprep.subr.mxu0 0.0
  %164 = vmatpush1.msra.mxu0 0.0
  %165 = vmatprep.subr.mxu0 0.0
  %166 = vmatpush1.msra.mxu0 0.0
  %167 = vmatprep.subr.mxu0 0.0
  %168 = vmatpush1.msra.mxu0 0.0
  %169 = vmatprep.subr.mxu0 0.0
  %170 = vmatpush1.msra.mxu0 0.0
  %171 = vmatprep.subr.mxu0 0.0
  %172 = vmatpush1.msra.mxu0 0.0
  %173 = vmatprep.subr.mxu0 0.0
  %174 = vmatpush1.msra.mxu0 0.0
  %175 = vmatprep.subr.mxu0 0.0
  %176 = vmatpush1.msra.mxu0 0.0
  %177 = vmatprep.subr.mxu0 0.0
  %178 = vmatpush1.msra.mxu0 0.0
  %179 = vmatprep.subr.mxu0 0.0
  %180 = vmatpush1.msra.mxu0 0.0
  %181 = vmatprep.subr.mxu0 0.0
  %182 = vmatpush1.msra.mxu0 0.0
  %183 = vmatprep.subr.mxu0 0.0
  %184 = vmatpush1.msra.mxu0 0.0
  %185 = vmatprep.subr.mxu0 0.0
  %186 = vmatpush1.msra.mxu0 0.0
  %187 = vmatprep.subr.mxu0 0.0
  %188 = vmatpush1.msra.mxu0 0.0
  %189 = vmatprep.subr.mxu0 0.0
  %190 = vmatpush1.msra.mxu0 0.0
  %191 = vmatprep.subr.mxu0 0.0
  %192 = vmatpush1.msra.mxu0 0.0
  %193 = vmatprep.subr.mxu0 0.0
  %194 = vmatpush1.msra.mxu0 0.0
  %195 = vmatprep.subr.mxu0 0.0
  %196 = vmatpush1.msra.mxu0 0.0
  %197 = vmatprep.subr.mxu0 0.0
  %198 = vmatpush1.msra.mxu0 0.0
  %199 = vmatprep.subr.mxu0 0.0
  %200 = vmatpush1.msra.mxu0 0.0
  %201 = vmatprep.subr.mxu0 0.0
  %202 = vmatpush1.msra.mxu0 0.0
  %203 = vmatprep.subr.mxu0 0.0
  %204 = vmatpush1.msra.mxu0 0.0
  %205 = vmatprep.subr.mxu0 0.0
  %206 = vmatpush1.msra.mxu0 0.0
  %207 = vmatprep.subr.mxu0 0.0
  %208 = vmatpush1.msra.mxu0 0.0
  %209 = vmatprep.subr.mxu0 0.0
  %210 = vmatpush1.msra.mxu0 0.0
  %211 = vmatprep.subr.mxu0 0.0
  %212 = vmatpush1.msra.mxu0 0.0
  %213 = vmatprep.subr.mxu0 0.0
  %214 = vmatpush1.msra.mxu0 0.0
  %215 = vmatprep.subr.mxu0 0.0
  %216 = vmatpush1.msra.mxu0 0.0
  %217 = vmatprep.subr.mxu0 0.0
  %218 = vmatpush1.msra.mxu0 0.0
  %219 = vmatprep.mubr.f32.mxu0 0.0
  %220 = vmatmul.mubr.f32.gmra.mrb[0].mxu0 %v149
  %v221 = vpop.f32.mrb[0].mxu0
  %v222 = vadd.f32 %v146, %v221
  %v223 = vpop.f32.mrb[0].mxu0
  %224 = vdwg.mxu0
  %225 = vst.msk [vmem:[%s3] sm:$0xff] %vm147, %v222
  // Predicated region
  $region10: #{tpu_custom_call.1} parent=0 // pred_check
    _
  $region11: #{tpu_custom_call.1} parent=0 // pred_check_branch
    %227 = sbr.rel (0) target = $region13
  $region12: #{tpu_custom_call.1} parent=0 // pred_region
    _
  $region13: #{tpu_custom_call.1} parent=0 // pred_fallthru
    _
  // Predicated region
  $region14: #{tpu_custom_call.1} parent=0 // pred_check
    _
  $region15: #{tpu_custom_call.1} parent=0 // pred_check_branch
    %229 = sbr.rel (0) target = $region17
  $region16: #{tpu_custom_call.1} parent=0 // pred_region
    _
  $region17: #{tpu_custom_call.1} parent=0 // pred_fallthru
    _

</llo_original>
